<compile_context>
chip_gen: v6e
topology: v6e:2x2x1
jax: 0.10.0
libtpu: 0.0.40
codegen_flags: <defaults>
</compile_context>

<pallas_src>
import math

import jax
import jax.numpy as jnp
from jax.experimental import pallas as pl
from jax.experimental.pallas import tpu as pltpu

_LANE = 128            # vreg lane width
_MAX_BLOCK_ROWS = 4096  # (4096,128) f32 per input + (2,4096,128) out, x2 buffers = 16 MiB


def _make_pi_kernel_split(c: float):
    """Fast-path kernel: separate home/away row-blocks, 2-plane output block."""
    ln10_over_c = math.log(10.0) / float(c)   # Python float literal, not captured tracer

    def pi_kernel(h_ref, a_ref, out_ref):
        # h_ref: (bt, 128) = R_alpha_h rows; a_ref: (bt, 128) = R_beta_a rows
        x_h = h_ref[...].astype(jnp.float32)
        x_a = a_ref[...].astype(jnp.float32)

        # 10^(|x|/c) - 1 == exp(|x| * ln(10)/c) - 1 (exp on the EUP, free slot).
        e_h = jnp.exp(jnp.abs(x_h) * ln10_over_c)
        e_a = jnp.exp(jnp.abs(x_a) * ln10_over_c)

        # Sign folded into the where (torch: x < 0 -> -1 else +1; zero -> +1).
        g_h = jnp.where(x_h < 0, 1.0 - e_h, e_h - 1.0)
        g_a = jnp.where(x_a < 0, 1.0 - e_a, e_a - 1.0)

        g_away = g_a - g_h
        out_ref[0] = g_away          # g_hat_away rows
        out_ref[1] = -g_away         # g_hat_home = -g_hat_away

    return pi_kernel


def _make_pi_kernel_stacked(c: float):
    """Fallback kernel: one stacked (2, rows, 128) block (plane 0 = R_alpha_h, 1 = R_beta_a)."""
    ln10_over_c = math.log(10.0) / float(c)

    def pi_kernel(x_ref, out_ref):
        x = x_ref[...].astype(jnp.float32)
        e = jnp.exp(jnp.abs(x) * ln10_over_c)
        g = jnp.where(x < 0, 1.0 - e, e - 1.0)
        g_away = g[1] - g[0]
        out_ref[0] = g_away
        out_ref[1] = -g_away

    return pi_kernel


class PiLayer:
    """JAX/Pallas equivalent of the PyTorch PiLayer (forward pass only)."""

    def __init__(self, in_channels: int, lambda_: float = 0.1,
                 gamma: float = 1.0, c: float = 3.0):
        assert in_channels % 2 == 0 and in_channels > 0
        self.in_channels = in_channels
        self.half = in_channels // 2
        self.c = float(c)
        self.lambda_ = float(lambda_)   # only used by the (unimplemented) backward
        self.gamma = float(gamma)       # only used by the (unimplemented) backward

        half = self.half

        if half % _LANE == 0:
            # ---------- fast path: no wrapper pad/slice/stack/concat ----------
            hr = half // _LANE                      # rows per half
            bt = min(hr, _MAX_BLOCK_ROWS)           # row-block size
            n_blocks = pl.cdiv(hr, bt)
            kernel = _make_pi_kernel_split(self.c)

            call = pl.pallas_call(
                kernel,
                out_shape=jax.ShapeDtypeStruct((2, hr, _LANE), jnp.float32),
                grid=(n_blocks,),
                in_specs=[
                    # home reshaped to (2, hr, 128): plane 0 = home[:half]
                    pl.BlockSpec((None, bt, _LANE), lambda i: (0, i, 0)),
                    # away reshaped to (2, hr, 128): plane 1 = away[half:]
                    pl.BlockSpec((None, bt, _LANE), lambda i: (1, i, 0)),
                ],
                out_specs=pl.BlockSpec((2, bt, _LANE), lambda i: (0, i, 0)),
                compiler_params=pltpu.CompilerParams(
                    dimension_semantics=("parallel",)),
            )

            in_channels_ = in_channels

            def forward(home, away):
                h3 = home.reshape(2, hr, _LANE)     # free, contiguous
                a3 = away.reshape(2, hr, _LANE)
                out = call(h3, a3)                  # (2, hr, 128): [g_away | g_home]
                return out.reshape(in_channels_)    # free reshape = the torch concat
        else:
            # ---------- fallback path: lane-pad halves, single full-array block ----------
            rows = pl.cdiv(half, _LANE)
            padded = rows * _LANE
            kernel = _make_pi_kernel_stacked(self.c)

            call = pl.pallas_call(
                kernel,
                out_shape=jax.ShapeDtypeStruct((2, rows, _LANE), jnp.float32),
            )

            def forward(home, away):
                r_h = home[:half]                   # R_alpha_h
                r_a = away[half:]                   # R_beta_a
                pad = padded - half
                if pad:
                    r_h = jnp.pad(r_h, (0, pad))
                    r_a = jnp.pad(r_a, (0, pad))
                x = jnp.stack([r_h, r_a], axis=0).reshape(2, rows, _LANE)
                out = call(x)                       # (2, rows, 128)
                flat = out.reshape(2, padded)
                return jnp.concatenate([flat[0, :half], flat[1, :half]], axis=0)

        self._forward = jax.jit(forward)

    def __call__(self, home: jax.Array, away: jax.Array) -> jax.Array:
        assert home.shape == (self.in_channels,)
        assert away.shape == (self.in_channels,)
        return self._forward(home, away)


def _reference_forward(home, away, c):
    half = home.shape[0] // 2
    r_alpha_h = home[:half].astype(jnp.float32)
    r_beta_a = away[half:].astype(jnp.float32)
    g_da = jnp.power(10.0, jnp.abs(r_beta_a) / c) - 1.0
    g_dh = jnp.power(10.0, jnp.abs(r_alpha_h) / c) - 1.0
    g_da = g_da * jnp.where(r_beta_a < 0, -1.0, 1.0)
    g_dh = g_dh * jnp.where(r_alpha_h < 0, -1.0, 1.0)
    return jnp.concatenate([g_da - g_dh, g_dh - g_da], axis=0)


if __name__ == "__main__":
    key = jax.random.PRNGKey(0)

    ok = True
    # 16 exercises the fallback (non-multiple-of-256) path, 512 the fast path.
    for in_channels in (16, 512):
        layer = PiLayer(in_channels, lambda_=0.1, gamma=1.0, c=3.0)

        key, k_h, k_a = jax.random.split(key, 3)
        home = jax.random.normal(k_h, (in_channels,), dtype=jnp.float32) * 2.0
        away = jax.random.normal(k_a, (in_channels,), dtype=jnp.float32) * 2.0

        out = layer(home, away)
        jax.block_until_ready(out)

        ref = _reference_forward(home, away, layer.c)
        if out.shape != (in_channels,) or not jnp.allclose(out, ref, rtol=1e-5, atol=1e-5):
            ok = False
            print(f"MISMATCH at in_channels={in_channels}")

    if ok:
        print("KERNEL_OK")
</pallas_src>

<mosaic_0001>
module attributes {stable_mosaic.version = 11 : i64} {
  func.func @pi_kernel(%arg0: memref<2x1x128xf32, #tpu.memory_space<vmem>>, %arg1: memref<2x1x128xf32, #tpu.memory_space<vmem>>) attributes {dimension_semantics = [], scalar_prefetch = 0 : i64, scratch_operands = 0 : i64, tpu.core_type = #tpu.core_type<tc>} {
    %c0 = arith.constant 0 : index
    %c0_0 = arith.constant 0 : index
    %c0_1 = arith.constant 0 : index
    %0 = vector.load %arg0[%c0, %c0_0, %c0_1] : memref<2x1x128xf32, #tpu.memory_space<vmem>>, vector<2x1x128xf32>
    %1 = math.absf %0 : vector<2x1x128xf32>
    %cst = arith.constant 0.767528355 : f32
    %2 = vector.broadcast %cst : f32 to vector<2x1x128xf32>
    %3 = arith.mulf %1, %2 : vector<2x1x128xf32>
    %4 = math.exp %3 : vector<2x1x128xf32>
    %cst_2 = arith.constant 0.000000e+00 : f32
    %5 = vector.broadcast %cst_2 : f32 to vector<2x1x128xf32>
    %6 = arith.cmpf olt, %0, %5 : vector<2x1x128xf32>
    %cst_3 = arith.constant 1.000000e+00 : f32
    %7 = vector.broadcast %cst_3 : f32 to vector<2x1x128xf32>
    %8 = arith.subf %7, %4 : vector<2x1x128xf32>
    %cst_4 = arith.constant 1.000000e+00 : f32
    %9 = vector.broadcast %cst_4 : f32 to vector<2x1x128xf32>
    %10 = arith.subf %4, %9 : vector<2x1x128xf32>
    %11 = arith.select %6, %8, %10 : vector<2x1x128xi1>, vector<2x1x128xf32>
    %12 = vector.extract_strided_slice %11 {offsets = [1, 0, 0], sizes = [1, 1, 128], strides = [1, 1, 1]} : vector<2x1x128xf32> to vector<1x1x128xf32>
    %13 = vector.shape_cast %12 : vector<1x1x128xf32> to vector<1x128xf32>
    %14 = vector.extract_strided_slice %11 {offsets = [0, 0, 0], sizes = [1, 1, 128], strides = [1, 1, 1]} : vector<2x1x128xf32> to vector<1x1x128xf32>
    %15 = vector.shape_cast %14 : vector<1x1x128xf32> to vector<1x128xf32>
    %16 = arith.subf %13, %15 : vector<1x128xf32>
    %c0_5 = arith.constant 0 : index
    %c0_6 = arith.constant 0 : index
    %c0_7 = arith.constant 0 : index
    %17 = vector.load %arg1[%c0_5, %c0_6, %c0_7] : memref<2x1x128xf32, #tpu.memory_space<vmem>>, vector<1x1x128xf32>
    %18 = vector.shape_cast %17 : vector<1x1x128xf32> to vector<1x128xf32>
    %19 = vector.shape_cast %16 : vector<1x128xf32> to vector<1x1x128xf32>
    tpu.vector_store %arg1[%c0_5, %c0_6, %c0_7], %19 {strides = array<i32>} : memref<2x1x128xf32, #tpu.memory_space<vmem>>, vector<1x1x128xf32>,
    %cst_8 = arith.constant 0.000000e+00 : f32
    %20 = vector.broadcast %cst_8 : f32 to vector<1x128xf32>
    %21 = arith.subf %20, %16 : vector<1x128xf32>
    %c1 = arith.constant 1 : index
    %c0_9 = arith.constant 0 : index
    %c0_10 = arith.constant 0 : index
    %22 = vector.load %arg1[%c1, %c0_9, %c0_10] : memref<2x1x128xf32, #tpu.memory_space<vmem>>, vector<1x1x128xf32>
    %23 = vector.shape_cast %22 : vector<1x1x128xf32> to vector<1x128xf32>
    %24 = vector.shape_cast %21 : vector<1x128xf32> to vector<1x1x128xf32>
    tpu.vector_store %arg1[%c1, %c0_9, %c0_10], %24 {strides = array<i32>} : memref<2x1x128xf32, #tpu.memory_space<vmem>>, vector<1x1x128xf32>,
    return
  }
}

</mosaic_0001>

<llo_original>
// kernel: forward.1
$region0: #{forward.1}
  #allocation0 [shape = 'u32[]', space=smem, size = 0x4, offset = 0x4, fixed_abs, tag = 'smem constant byte address 0x4 - core index']
  #allocation1 [shape = 'u32[144,128]{1,0:T(1,128)}', space=vmem, size = 0x12000, scoped, tag = 'internal scratch']
  %s0 = inlined_call_operand.vmem [shape: f32[2,1,128], index: 0, kind: input, shape index: {}]
  %s1 = inlined_call_operand.vmem [shape: f32[2,1,128], index: 1, kind: output, shape index: {}]
  %s2 = sld [smem:[#allocation0]]
  $region14: #{forward.1} parent=0
    _
  %s4 = ssub.s32 1, %s2
  %s5 = scalar_select 0, %s4, %s2
  // Predicated region
  $region2: #{forward.1} parent=0 // pred_check
    _
  $region3: #{forward.1} parent=0 // pred_check_branch
    %7 = sbr.rel (0) target = $region5
  $region4: #{forward.1} parent=0 // pred_region
    _
  $region5: #{forward.1} parent=0 // pred_fallthru
    _
  %v8 = vld [vmem:[%s0] sm:$0x1]
  %v9 = vld [vmem:[%s0 + $0x1] sm:$0x1]
  %v10 = vand.u32 2147483647, %v8
  %v11 = vand.u32 2147483647, %v9
  %v12 = vmul.f32 %v10, 0.76752836
  %v13 = vmul.f32 %v11, 0.76752836
  %v14 = vmul.f32 %v12, 1.442695
  %v15 = vpow.pop %v14
  %v16 = vmul.f32 %v13, 1.442695
  %v17 = vpow.pop %v16
  %vm18 = vcmp.lt.f32.partialorder %v8, 0.0
  %vm19 = vcmp.lt.f32.partialorder %v9, 0.0
  %v20 = vsub.f32 1.0, %v15
  %v21 = vsub.f32 1.0, %v17
  %v22 = vsub.f32 %v15, 1.0
  %v23 = vsub.f32 %v17, 1.0
  %v24 = vsel %vm18, %v20, %v22
  %v25 = vsel %vm19, %v21, %v23
  %v26 = vsub.f32 %v25, %v24
  %27 = vst [vmem:[%s1] sm:$0x1] %v26
  %v28 = vsub.f32 0.0, %v26
  %s29 = scalar_lea.vmem %s1, 1
  %30 = vst [vmem:[%s29] sm:$0x1] %v28
  // Predicated region
  $region6: #{forward.1} parent=0 // pred_check
    _
  $region7: #{forward.1} parent=0 // pred_check_branch
    %32 = sbr.rel (0) target = $region9
  $region8: #{forward.1} parent=0 // pred_region
    _
  $region9: #{forward.1} parent=0 // pred_fallthru
    _
  // Predicated region
  $region10: #{forward.1} parent=0 // pred_check
    _
  $region11: #{forward.1} parent=0 // pred_check_branch
    %34 = sbr.rel (0) target = $region13
  $region12: #{forward.1} parent=0 // pred_region
    _
  $region13: #{forward.1} parent=0 // pred_fallthru
    _

</llo_original>
